<compile_context>
chip_gen: v5e
topology: v5e:2x2
jax: 0.10.0
libtpu: 0.0.40
codegen_flags: <defaults>
</compile_context>

<pallas_src>
import jax
import jax.numpy as jnp
from jax.experimental import pallas as pl
from jax.experimental.pallas import tpu as pltpu


def spaceatt_kernel(low_ref, high_ref, wq_ref, bq_ref, wk_ref, bk_ref,
                    wv_ref, bv_ref, ws_ref, bs_ref, o_ref):
    # low_ref / high_ref / o_ref : (Bn, C, S)   one tile of Bn batch elements
    # wq (1, C) bq (1, 1) | wk, wv (C/2, C) bk, bv (C/2, 1) | ws (C, C/2) bs (C, 1)
    wq = wq_ref[...]
    bq = bq_ref[...]
    wk = wk_ref[...]
    bk = bk_ref[...]
    wv = wv_ref[...]
    bv = bv_ref[...]
    ws = ws_ref[...]
    bs = bs_ref[...]

    for b in range(low_ref.shape[0]):            # Bn is small & static -> unrolled
        low = low_ref[b].astype(jnp.float32)     # (C, S)
        high = high_ref[b].astype(jnp.float32)   # (C, S)

        q = jnp.dot(wq, low, preferred_element_type=jnp.float32) + bq    # (1, S)
        k = jnp.dot(wk, low, preferred_element_type=jnp.float32) + bk    # (C/2, S)
        v = jnp.dot(wv, high, preferred_element_type=jnp.float32) + bv   # (C/2, S)

        att = q * k + v                                                  # (C/2, S)
        out = jnp.dot(ws, att, preferred_element_type=jnp.float32) + bs  # (C, S)
        o_ref[b] = jnp.maximum(out, 0.0).astype(o_ref.dtype)


def _fold_conv_bn(w, b, gamma, beta, mean, var, eps=1e-5):
    """Fold 1x1 Conv2d + eval-mode BatchNorm2d into (weight, bias) on channels."""
    w2 = w.reshape(w.shape[0], w.shape[1]).astype(jnp.float32)   # (out, in)
    scale = (gamma / jnp.sqrt(var + eps)).astype(jnp.float32)
    return scale[:, None] * w2, scale * (b - mean) + beta


def _pick_spatial_tile(hw, c, itemsize, target_bytes=4 << 20):
    """Tile H*W (multiples of 128) only when one batch element exceeds the target."""
    if c * hw * itemsize <= target_bytes or hw % 128 != 0:
        # TODO(synk): if H*W is not a multiple of 128 the stores are masked
        # (vst.msk); pad the spatial axis in the wrapper for full lane density.
        return hw
    tiles = [s for s in range(128, hw + 1, 128)
             if hw % s == 0 and c * s * itemsize <= target_bytes]
    return tiles[-1] if tiles else hw


def _pick_batch_block(n, per_elem_bytes, target_bytes=4 << 20, max_unroll=8):
    """Largest divisor of n with block <= target, preferring >=2 grid steps."""
    divisors = [d for d in range(1, n + 1) if n % d == 0]
    best = 1
    for d in divisors:
        if d <= max_unroll and d * per_elem_bytes <= target_bytes:
            best = d
    if n >= 2 and n // best < 2:
        smaller = [d for d in divisors if d < best and n // d >= 2]
        if smaller:
            best = smaller[-1]
    return best


def spaceatt(low, high, params):
    """low, high: (N, C, H, W); params: dict of conv weights/biases and BN stats."""
    N, C, H, W = low.shape
    assert high.shape == low.shape
    Ch = C // 2
    HW = H * W
    p = params

    # ---- fold BN into the 1x1 convs (eval-mode BN), collapse the Q path ------
    wq1, bq1 = _fold_conv_bn(p["q1_w"], p["q1_b"], *p["q1_bn"])   # (Ch, C)
    wq2, bq2 = _fold_conv_bn(p["q2_w"], p["q2_b"], *p["q2_bn"])   # (1, Ch)
    wq = wq2 @ wq1                                                # (1, C)
    bq = (wq2 @ bq1 + bq2).reshape(1, 1)
    wk, bk = _fold_conv_bn(p["k_w"], p["k_b"], *p["k_bn"])        # (Ch, C)
    wv, bv = _fold_conv_bn(p["v_w"], p["v_b"], *p["v_bn"])        # (Ch, C)
    ws, bs = _fold_conv_bn(p["s_w"], p["s_b"], *p["s_bn"])        # (C, Ch)
    bk = bk.reshape(Ch, 1)
    bv = bv.reshape(Ch, 1)
    bs = bs.reshape(C, 1)

    # free views: H*W fused onto the lane axis, channels on sublanes
    low2 = low.reshape(N, C, HW)
    high2 = high.reshape(N, C, HW)

    itemsize = jnp.dtype(low.dtype).itemsize
    S = _pick_spatial_tile(HW, C, itemsize)
    Bn = _pick_batch_block(N, C * S * itemsize) if S == HW else 1
    grid = (N // Bn, HW // S)

    out = pl.pallas_call(
        spaceatt_kernel,
        out_shape=jax.ShapeDtypeStruct((N, C, HW), low.dtype),
        grid=grid,
        in_specs=[
            pl.BlockSpec((Bn, C, S), lambda i, j: (i, 0, j)),   # low
            pl.BlockSpec((Bn, C, S), lambda i, j: (i, 0, j)),   # high
            pl.BlockSpec((1, C), lambda i, j: (0, 0)),          # wq
            pl.BlockSpec((1, 1), lambda i, j: (0, 0)),          # bq
            pl.BlockSpec((Ch, C), lambda i, j: (0, 0)),         # wk
            pl.BlockSpec((Ch, 1), lambda i, j: (0, 0)),         # bk
            pl.BlockSpec((Ch, C), lambda i, j: (0, 0)),         # wv
            pl.BlockSpec((Ch, 1), lambda i, j: (0, 0)),         # bv
            pl.BlockSpec((C, Ch), lambda i, j: (0, 0)),         # ws
            pl.BlockSpec((C, 1), lambda i, j: (0, 0)),          # bs
        ],
        out_specs=pl.BlockSpec((Bn, C, S), lambda i, j: (i, 0, j)),
        compiler_params=pltpu.CompilerParams(
            dimension_semantics=("parallel", "parallel"),
            vmem_limit_bytes=48 * 1024 * 1024,
        ),
    )(low2, high2, wq, bq, wk, bk, wv, bv, ws, bs)
    return out.reshape(N, C, H, W)


def spaceatt_ref(low, high, params):
    """Pure-JAX reference: explicit 1x1 convs + eval-mode BatchNorm, no folding."""
    p = params

    def conv1x1(x, w, b):
        return jnp.einsum("oc,nchw->nohw", w[:, :, 0, 0], x) + b[None, :, None, None]

    def bn(x, stats, eps=1e-5):
        gamma, beta, mean, var = stats
        inv = gamma / jnp.sqrt(var + eps)
        return (x - mean[None, :, None, None]) * inv[None, :, None, None] \
            + beta[None, :, None, None]

    Q = bn(conv1x1(bn(conv1x1(low, p["q1_w"], p["q1_b"]), p["q1_bn"]),
                   p["q2_w"], p["q2_b"]), p["q2_bn"])
    K = bn(conv1x1(low, p["k_w"], p["k_b"]), p["k_bn"])
    V = bn(conv1x1(high, p["v_w"], p["v_b"]), p["v_bn"])
    att = Q * K + V
    return jnp.maximum(bn(conv1x1(att, p["s_w"], p["s_b"]), p["s_bn"]), 0.0)


if __name__ == "__main__":
    N, C, H, W = 2, 4, 16, 16
    Ch = C // 2

    key = jax.random.PRNGKey(0)
    keys = iter(jax.random.split(key, 24))

    def conv_params(kw, kb, out_c, in_c):
        w = jax.random.normal(kw, (out_c, in_c, 1, 1), jnp.float32) * 0.3
        b = jax.random.normal(kb, (out_c,), jnp.float32) * 0.1
        return w, b

    def bn_params(k, c):
        k1, k2, k3, k4 = jax.random.split(k, 4)
        gamma = 1.0 + 0.1 * jax.random.normal(k1, (c,), jnp.float32)
        beta = 0.1 * jax.random.normal(k2, (c,), jnp.float32)
        mean = 0.1 * jax.random.normal(k3, (c,), jnp.float32)
        var = jax.random.uniform(k4, (c,), jnp.float32, minval=0.5, maxval=1.5)
        return (gamma, beta, mean, var)

    low = jax.random.normal(next(keys), (N, C, H, W), jnp.float32)
    high = jax.random.normal(next(keys), (N, C, H, W), jnp.float32)

    params = {}
    params["q1_w"], params["q1_b"] = conv_params(next(keys), next(keys), Ch, C)
    params["q1_bn"] = bn_params(next(keys), Ch)
    params["q2_w"], params["q2_b"] = conv_params(next(keys), next(keys), 1, Ch)
    params["q2_bn"] = bn_params(next(keys), 1)
    params["k_w"], params["k_b"] = conv_params(next(keys), next(keys), Ch, C)
    params["k_bn"] = bn_params(next(keys), Ch)
    params["v_w"], params["v_b"] = conv_params(next(keys), next(keys), Ch, C)
    params["v_bn"] = bn_params(next(keys), Ch)
    params["s_w"], params["s_b"] = conv_params(next(keys), next(keys), C, Ch)
    params["s_bn"] = bn_params(next(keys), C)

    out = spaceatt(low, high, params)
    out = jax.block_until_ready(out)

    ref = spaceatt_ref(low, high, params)
    assert out.shape == (N, C, H, W)
    err = jnp.max(jnp.abs(out - ref))
    assert jnp.allclose(out, ref, atol=1e-4, rtol=1e-4), f"mismatch vs reference: {err}"

    print("KERNEL_OK")
</pallas_src>

<mosaic_0001>
module attributes {stable_mosaic.version = 11 : i64} {
  func.func @spaceatt_kernel(%arg0: i32, %arg1: i32, %arg2: memref<1x4x256xf32, #tpu.memory_space<vmem>>, %arg3: memref<1x4x256xf32, #tpu.memory_space<vmem>>, %arg4: memref<1x4xf32, #tpu.memory_space<vmem>>, %arg5: memref<1x1xf32, #tpu.memory_space<vmem>>, %arg6: memref<2x4xf32, #tpu.memory_space<vmem>>, %arg7: memref<2x1xf32, #tpu.memory_space<vmem>>, %arg8: memref<2x4xf32, #tpu.memory_space<vmem>>, %arg9: memref<2x1xf32, #tpu.memory_space<vmem>>, %arg10: memref<4x2xf32, #tpu.memory_space<vmem>>, %arg11: memref<4x1xf32, #tpu.memory_space<vmem>>, %arg12: memref<1x4x256xf32, #tpu.memory_space<vmem>>) attributes {dimension_semantics = [#tpu.dimension_semantics<parallel>, #tpu.dimension_semantics<parallel>], iteration_bounds = array<i64: 2, 1>, scalar_prefetch = 0 : i64, scratch_operands = 0 : i64, tpu.core_type = #tpu.core_type<tc>, window_params = [{transform_indices = @transform_0, window_bounds = array<i64: 1, 4, 256>}, {transform_indices = @transform_1, window_bounds = array<i64: 1, 4, 256>}, {pipeline_mode = #tpu.pipeline_mode<synchronous>, transform_indices = @transform_2, window_bounds = array<i64: 1, 4>}, {pipeline_mode = #tpu.pipeline_mode<synchronous>, transform_indices = @transform_3, window_bounds = array<i64: 1, 1>}, {pipeline_mode = #tpu.pipeline_mode<synchronous>, transform_indices = @transform_4, window_bounds = array<i64: 2, 4>}, {pipeline_mode = #tpu.pipeline_mode<synchronous>, transform_indices = @transform_5, window_bounds = array<i64: 2, 1>}, {pipeline_mode = #tpu.pipeline_mode<synchronous>, transform_indices = @transform_6, window_bounds = array<i64: 2, 4>}, {pipeline_mode = #tpu.pipeline_mode<synchronous>, transform_indices = @transform_7, window_bounds = array<i64: 2, 1>}, {pipeline_mode = #tpu.pipeline_mode<synchronous>, transform_indices = @transform_8, window_bounds = array<i64: 4, 2>}, {pipeline_mode = #tpu.pipeline_mode<synchronous>, transform_indices = @transform_9, window_bounds = array<i64: 4, 1>}, {transform_indices = @transform_10, window_bounds = array<i64: 1, 4, 256>}]} {
    %c0 = arith.constant 0 : index
    %c0_0 = arith.constant 0 : index
    %0 = vector.load %arg4[%c0, %c0_0] : memref<1x4xf32, #tpu.memory_space<vmem>>, vector<1x4xf32>
    %c0_1 = arith.constant 0 : index
    %c0_2 = arith.constant 0 : index
    %1 = vector.load %arg5[%c0_1, %c0_2] : memref<1x1xf32, #tpu.memory_space<vmem>>, vector<1x1xf32>
    %c0_3 = arith.constant 0 : index
    %c0_4 = arith.constant 0 : index
    %2 = vector.load %arg6[%c0_3, %c0_4] : memref<2x4xf32, #tpu.memory_space<vmem>>, vector<2x4xf32>
    %c0_5 = arith.constant 0 : index
    %c0_6 = arith.constant 0 : index
    %3 = vector.load %arg7[%c0_5, %c0_6] : memref<2x1xf32, #tpu.memory_space<vmem>>, vector<2x1xf32>
    %c0_7 = arith.constant 0 : index
    %c0_8 = arith.constant 0 : index
    %4 = vector.load %arg8[%c0_7, %c0_8] : memref<2x4xf32, #tpu.memory_space<vmem>>, vector<2x4xf32>
    %c0_9 = arith.constant 0 : index
    %c0_10 = arith.constant 0 : index
    %5 = vector.load %arg9[%c0_9, %c0_10] : memref<2x1xf32, #tpu.memory_space<vmem>>, vector<2x1xf32>
    %c0_11 = arith.constant 0 : index
    %c0_12 = arith.constant 0 : index
    %6 = vector.load %arg10[%c0_11, %c0_12] : memref<4x2xf32, #tpu.memory_space<vmem>>, vector<4x2xf32>
    %c0_13 = arith.constant 0 : index
    %c0_14 = arith.constant 0 : index
    %7 = vector.load %arg11[%c0_13, %c0_14] : memref<4x1xf32, #tpu.memory_space<vmem>>, vector<4x1xf32>
    %c0_15 = arith.constant 0 : index
    %c0_16 = arith.constant 0 : index
    %c0_17 = arith.constant 0 : index
    %8 = vector.load %arg2[%c0_15, %c0_16, %c0_17] : memref<1x4x256xf32, #tpu.memory_space<vmem>>, vector<1x4x256xf32>
    %9 = vector.shape_cast %8 : vector<1x4x256xf32> to vector<4x256xf32>
    %c0_18 = arith.constant 0 : index
    %c0_19 = arith.constant 0 : index
    %c0_20 = arith.constant 0 : index
    %10 = vector.load %arg3[%c0_18, %c0_19, %c0_20] : memref<1x4x256xf32, #tpu.memory_space<vmem>>, vector<1x4x256xf32>
    %11 = vector.shape_cast %10 : vector<1x4x256xf32> to vector<4x256xf32>
    %cst = arith.constant dense<0.000000e+00> : vector<1x256xf32>
    %12 = tpu.matmul %0, %9, %cst {dimension_numbers = #tpu.dot_dimension_numbers<[1], [0], [0], [1], [0, 0, 1, 1], [], []>} : vector<1x4xf32>, vector<4x256xf32>, vector<1x256xf32> -> vector<1x256xf32>
    %13 = vector.broadcast %1 : vector<1x1xf32> to vector<1x256xf32>
    %14 = arith.addf %12, %13 : vector<1x256xf32>
    %cst_21 = arith.constant dense<0.000000e+00> : vector<2x256xf32>
    %15 = tpu.matmul %2, %9, %cst_21 {dimension_numbers = #tpu.dot_dimension_numbers<[1], [0], [0], [1], [0, 0, 1, 1], [], []>} : vector<2x4xf32>, vector<4x256xf32>, vector<2x256xf32> -> vector<2x256xf32>
    %16 = vector.broadcast %3 : vector<2x1xf32> to vector<2x256xf32>
    %17 = arith.addf %15, %16 : vector<2x256xf32>
    %cst_22 = arith.constant dense<0.000000e+00> : vector<2x256xf32>
    %18 = tpu.matmul %4, %11, %cst_22 {dimension_numbers = #tpu.dot_dimension_numbers<[1], [0], [0], [1], [0, 0, 1, 1], [], []>} : vector<2x4xf32>, vector<4x256xf32>, vector<2x256xf32> -> vector<2x256xf32>
    %19 = vector.broadcast %5 : vector<2x1xf32> to vector<2x256xf32>
    %20 = arith.addf %18, %19 : vector<2x256xf32>
    %21 = vector.broadcast %14 : vector<1x256xf32> to vector<2x256xf32>
    %22 = arith.mulf %21, %17 : vector<2x256xf32>
    %23 = arith.addf %22, %20 : vector<2x256xf32>
    %cst_23 = arith.constant dense<0.000000e+00> : vector<4x256xf32>
    %24 = tpu.matmul %6, %23, %cst_23 {dimension_numbers = #tpu.dot_dimension_numbers<[1], [0], [0], [1], [0, 0, 1, 1], [], []>} : vector<4x2xf32>, vector<2x256xf32>, vector<4x256xf32> -> vector<4x256xf32>
    %25 = vector.broadcast %7 : vector<4x1xf32> to vector<4x256xf32>
    %26 = arith.addf %24, %25 : vector<4x256xf32>
    %cst_24 = arith.constant 0.000000e+00 : f32
    %27 = vector.broadcast %cst_24 : f32 to vector<4x256xf32>
    %28 = arith.maximumf %26, %27 : vector<4x256xf32>
    %c0_25 = arith.constant 0 : index
    %c0_26 = arith.constant 0 : index
    %c0_27 = arith.constant 0 : index
    %29 = vector.load %arg12[%c0_25, %c0_26, %c0_27] : memref<1x4x256xf32, #tpu.memory_space<vmem>>, vector<1x4x256xf32>
    %30 = vector.shape_cast %29 : vector<1x4x256xf32> to vector<4x256xf32>
    %31 = vector.shape_cast %28 : vector<4x256xf32> to vector<1x4x256xf32>
    tpu.vector_store %arg12[%c0_25, %c0_26, %c0_27], %31 {strides = array<i32>} : memref<1x4x256xf32, #tpu.memory_space<vmem>>, vector<1x4x256xf32>,
    return
  }
  func.func @transform_0(%arg0: i32, %arg1: i32) -> (i32, i32, i32) {
    %c0_i32 = arith.constant 0 : i32
    %c0_i32_0 = arith.constant 0 : i32
    return %arg0, %c0_i32, %arg1 : i32, i32, i32
  }
  func.func @transform_1(%arg0: i32, %arg1: i32) -> (i32, i32, i32) {
    %c0_i32 = arith.constant 0 : i32
    %c0_i32_0 = arith.constant 0 : i32
    return %arg0, %c0_i32, %arg1 : i32, i32, i32
  }
  func.func @transform_2(%arg0: i32, %arg1: i32) -> (i32, i32) {
    %c0_i32 = arith.constant 0 : i32
    %c0_i32_0 = arith.constant 0 : i32
    %c0_i32_1 = arith.constant 0 : i32
    return %c0_i32, %c0_i32_0 : i32, i32
  }
  func.func @transform_3(%arg0: i32, %arg1: i32) -> (i32, i32) {
    %c0_i32 = arith.constant 0 : i32
    %c0_i32_0 = arith.constant 0 : i32
    %c0_i32_1 = arith.constant 0 : i32
    return %c0_i32, %c0_i32_0 : i32, i32
  }
  func.func @transform_4(%arg0: i32, %arg1: i32) -> (i32, i32) {
    %c0_i32 = arith.constant 0 : i32
    %c0_i32_0 = arith.constant 0 : i32
    %c0_i32_1 = arith.constant 0 : i32
    return %c0_i32, %c0_i32_0 : i32, i32
  }
  func.func @transform_5(%arg0: i32, %arg1: i32) -> (i32, i32) {
    %c0_i32 = arith.constant 0 : i32
    %c0_i32_0 = arith.constant 0 : i32
    %c0_i32_1 = arith.constant 0 : i32
    return %c0_i32, %c0_i32_0 : i32, i32
  }
  func.func @transform_6(%arg0: i32, %arg1: i32) -> (i32, i32) {
    %c0_i32 = arith.constant 0 : i32
    %c0_i32_0 = arith.constant 0 : i32
    %c0_i32_1 = arith.constant 0 : i32
    return %c0_i32, %c0_i32_0 : i32, i32
  }
  func.func @transform_7(%arg0: i32, %arg1: i32) -> (i32, i32) {
    %c0_i32 = arith.constant 0 : i32
    %c0_i32_0 = arith.constant 0 : i32
    %c0_i32_1 = arith.constant 0 : i32
    return %c0_i32, %c0_i32_0 : i32, i32
  }
  func.func @transform_8(%arg0: i32, %arg1: i32) -> (i32, i32) {
    %c0_i32 = arith.constant 0 : i32
    %c0_i32_0 = arith.constant 0 : i32
    %c0_i32_1 = arith.constant 0 : i32
    return %c0_i32, %c0_i32_0 : i32, i32
  }
  func.func @transform_9(%arg0: i32, %arg1: i32) -> (i32, i32) {
    %c0_i32 = arith.constant 0 : i32
    %c0_i32_0 = arith.constant 0 : i32
    %c0_i32_1 = arith.constant 0 : i32
    return %c0_i32, %c0_i32_0 : i32, i32
  }
  func.func @transform_10(%arg0: i32, %arg1: i32) -> (i32, i32, i32) {
    %c0_i32 = arith.constant 0 : i32
    %c0_i32_0 = arith.constant 0 : i32
    return %arg0, %c0_i32, %arg1 : i32, i32, i32
  }
}

</mosaic_0001>

<llo_original>
// kernel: tpu_custom_call.1
$region0: #{tpu_custom_call.1}
  #allocation0 [shape = 'u32[]', space=smem, size = 0x4, offset = 0x4, fixed_abs, tag = 'smem constant byte address 0x4 - core index']
  #allocation1 [shape = 'u32[72,128]{1,0:T(1,128)}', space=vmem, size = 0x9000, scoped, tag = 'internal scratch']
  #allocation2 [shape = 'f32[1,1]{1,0:T(1,128)S(1)}', space=vmem, size = 0x200, scoped, tag = 'scoped memory for tpu_custom_call.1']
  %s0 = inlined_call_operand.hbm [shape: f32[2,4,256], index: 0, kind: input, shape index: {}]
  %s1 = inlined_call_operand.hbm [shape: f32[2,4,256], index: 1, kind: input, shape index: {}]
  %s2 = inlined_call_operand.vmem [shape: f32[1,4], index: 2, kind: input, shape index: {}]
  %s3 = inlined_call_operand.<no memory space> [shape: f32[1,1], index: 3, kind: input, shape index: {}]
  %s4 = inlined_call_operand.vmem [shape: f32[2,4], index: 4, kind: input, shape index: {}]
  %s5 = inlined_call_operand.vmem [shape: f32[2,1], index: 5, kind: input, shape index: {}]
  %s6 = inlined_call_operand.vmem [shape: f32[2,4], index: 6, kind: input, shape index: {}]
  %s7 = inlined_call_operand.vmem [shape: f32[2,1], index: 7, kind: input, shape index: {}]
  %s8 = inlined_call_operand.vmem [shape: f32[4,2], index: 8, kind: input, shape index: {}]
  %s9 = inlined_call_operand.vmem [shape: f32[4,1], index: 9, kind: input, shape index: {}]
  %s10 = inlined_call_operand.hbm [shape: f32[2,4,256], index: 10, kind: output, shape index: {}]
  %s11 = sld [smem:[#allocation0]]
  $region81: #{tpu_custom_call.1} parent=0
    _
  %s13 = ssub.s32 1, %s11
  %s14 = scalar_select 0, %s13, %s11
  %v15 = vstv %s3
  %16 = vst [vmem:[#allocation2] sm:$0x1] %v15
  $region1: #{tpu_custom_call.1} parent=0
    #allocation3 [shape = 'u8[8192]{0}', space=vmem, size = 0x2000, scoped, tag = 'input window, operand 0']
    #allocation4 [shape = 's32[2]{0}', space=sflag, size = 0x8, scoped, tag = 'scoped memory for tpu_custom_call.1']
    #allocation5 [shape = 's32[2]{0}', space=sflag, size = 0x8, scoped, tag = 'scoped memory for tpu_custom_call.1']
    #allocation6 [shape = 'u8[8192]{0}', space=vmem, size = 0x2000, scoped, tag = 'input window, operand 1']
    #allocation7 [shape = 's32[2]{0}', space=sflag, size = 0x8, scoped, tag = 'scoped memory for tpu_custom_call.1']
    #allocation8 [shape = 'u8[8192]{0}', space=vmem, size = 0x2000, scoped, tag = 'output window, operand 0']
    %17 = vsyncpa [#allocation4], 0
    %s18 = scalar_lea.sflag [#allocation4], 1
    %19 = vsyncpa %s18, 0
    %20 = vsyncpa [#allocation7], 0
    %s21 = scalar_lea.sflag [#allocation7], 1
    %22 = vsyncpa %s21, 0
    %23 = vsyncpa [#allocation5], 0
    %s24 = scalar_lea.sflag [#allocation5], 1
    %25 = vsyncpa %s24, 0
    loop: start=0, step=1, limit=4
    $region2: #{tpu_custom_call.1} parent=1 // loop_pre_header
      _
    $region3: #{tpu_custom_call.1} parent=1 // loop_header
      %s27 = sphi 0, %s31
      %p28 = scmp.ge.s32.totalorder %s27, 4
      %s34 = sphi 0, %s46
      %s35 = sphi 0, %s42
      %s36 = sphi 0, %s34
      %s37 = sphi 0, %s35
      %s38 = sphi 0, %s36
      %s39 = sphi 0, %s37
      %s51 = sphi 0, %s53
      %s54 = sphi 0, %s51
      %s55 = sphi 0, %s54
      %s71 = sphi 0, %s55
      %s79 = sphi 0, %s81
      %s82 = sphi 0, %s79
      %s83 = sphi 0, %s82
      %s99 = sphi 0, %s83
      %s103 = sphi 0, %s103
      %s105 = sphi 0, %s103
      %s106 = sphi 0, %s105
      %s120 = sphi 0, %s106
      %s124 = sphi 0, %s124
      %s126 = sphi 0, %s124
      %s127 = sphi 0, %s126
      %s141 = sphi 0, %s127
      %s145 = sphi 0, %s145
      %s147 = sphi 0, %s145
      %s148 = sphi 0, %s147
      %s162 = sphi 0, %s148
      %s166 = sphi 0, %s166
      %s168 = sphi 0, %s166
      %s169 = sphi 0, %s168
      %s183 = sphi 0, %s169
      %s187 = sphi 0, %s187
      %s189 = sphi 0, %s187
      %s190 = sphi 0, %s189
      %s204 = sphi 0, %s190
      %s208 = sphi 0, %s208
      %s210 = sphi 0, %s208
      %s211 = sphi 0, %s210
      %s225 = sphi 0, %s211
      %s229 = sphi 0, %s229
      %s231 = sphi 0, %s229
      %s232 = sphi 0, %s231
      %s246 = sphi 0, %s232
      %s250 = sphi 0, %s250
      %s252 = sphi 0, %s250
      %s253 = sphi 0, %s252
      %s267 = sphi 0, %s253
      %s275 = sphi 0, %s277
      %s278 = sphi 0, %s275
      %s279 = sphi 0, %s278
      %s295 = sphi 0, %s279
    $region4: #{tpu_custom_call.1} parent=1 // loop_header_branch
      %30 = sbr.rel (%p28) target = $region8
    $region5: #{tpu_custom_call.1} parent=1 // loop_body
      %s32 = ssub.s32 %s27, 1
      %s33 = ssub.s32 %s27, 2
      %s40 = sadd.s32 1, %s35
      %p41 = scmp.ge.s32.totalorder %s40, 1
      %s42 = scalar_select %p41, 0, %s40
      %s43 = sadd.s32 1, %s34
      %s44 = scalar_select %p41, %s43, %s34
      %p45 = scmp.ge.s32.totalorder %s44, 2
      %s46 = scalar_select %p45, 0, %s44
      %s47 = ssub.s32 %s34, %s46
      %s48 = ssub.s32 %s35, %s42
      %s49 = sor.u32 %s47, %s48
      %p50 = scmp.eq.s32.totalorder %s49, 0
      %s52 = sadd.s32 %s51, 1
      %s53 = scalar_select %p50, %s51, %s52
      %p56 = pneg %p50
      %p57 = scmp.eq.s32.totalorder %s27, 1
      %p58 = por %p56, %p57
      %p59 = scmp.ne.s32.totalorder %s51, %s54
      %p60 = scmp.eq.s32.totalorder %s27, 0
      %p61 = por %p59, %p60
      %p62 = scmp.ne.s32.totalorder %s51, %s54
      %p63 = scmp.eq.s32.totalorder %s32, 1
      %p64 = por %p62, %p63
      %p65 = scmp.ne.s32.totalorder %s54, %s55
      %p66 = scmp.eq.s32.totalorder %s32, 0
      %p67 = por %p65, %p66
      %p68 = scmp.ne.s32.totalorder %s54, %s55
      %p69 = scmp.eq.s32.totalorder %s33, 1
      %p70 = por %p68, %p69
      %p72 = scmp.ne.s32.totalorder %s55, %s71
      %p73 = scmp.eq.s32.totalorder %s33, 0
      %p74 = por %p72, %p73
      %s75 = ssub.s32 %s34, %s46
      %s76 = ssub.s32 %s35, %s42
      %s77 = sor.u32 %s75, %s76
      %p78 = scmp.eq.s32.totalorder %s77, 0
      %s80 = sadd.s32 %s79, 1
      %s81 = scalar_select %p78, %s79, %s80
      %p84 = pneg %p78
      %p85 = scmp.eq.s32.totalorder %s27, 1
      %p86 = por %p84, %p85
      %p87 = scmp.ne.s32.totalorder %s79, %s82
      %p88 = scmp.eq.s32.totalorder %s27, 0
      %p89 = por %p87, %p88
      %p90 = scmp.ne.s32.totalorder %s79, %s82
      %p91 = scmp.eq.s32.totalorder %s32, 1
      %p92 = por %p90, %p91
      %p93 = scmp.ne.s32.totalorder %s82, %s83
      %p94 = scmp.eq.s32.totalorder %s32, 0
      %p95 = por %p93, %p94
      %p96 = scmp.ne.s32.totalorder %s82, %s83
      %p97 = scmp.eq.s32.totalorder %s33, 1
      %p98 = por %p96, %p97
      %p100 = scmp.ne.s32.totalorder %s83, %s99
      %p101 = scmp.eq.s32.totalorder %s33, 0
      %p102 = por %p100, %p101
      %s104 = sadd.s32 %s103, 1
      %p107 = scmp.eq.s32.totalorder %s27, 1
      %p108 = scmp.ne.s32.totalorder %s103, %s105
      %p109 = scmp.eq.s32.totalorder %s27, 0
      %p110 = por %p108, %p109
      %p111 = scmp.ne.s32.totalorder %s103, %s105
      %p112 = scmp.eq.s32.totalorder %s32, 1
      %p113 = por %p111, %p112
      %p114 = scmp.ne.s32.totalorder %s105, %s106
      %p115 = scmp.eq.s32.totalorder %s32, 0
      %p116 = por %p114, %p115
      %p117 = scmp.ne.s32.totalorder %s105, %s106
      %p118 = scmp.eq.s32.totalorder %s33, 1
      %p119 = por %p117, %p118
      %p121 = scmp.ne.s32.totalorder %s106, %s120
      %p122 = scmp.eq.s32.totalorder %s33, 0
      %p123 = por %p121, %p122
      %s125 = sadd.s32 %s124, 1
      %p128 = scmp.eq.s32.totalorder %s27, 1
      %p129 = scmp.ne.s32.totalorder %s124, %s126
      %p130 = scmp.eq.s32.totalorder %s27, 0
      %p131 = por %p129, %p130
      %p132 = scmp.ne.s32.totalorder %s124, %s126
      %p133 = scmp.eq.s32.totalorder %s32, 1
      %p134 = por %p132, %p133
      %p135 = scmp.ne.s32.totalorder %s126, %s127
      %p136 = scmp.eq.s32.totalorder %s32, 0
      %p137 = por %p135, %p136
      %p138 = scmp.ne.s32.totalorder %s126, %s127
      %p139 = scmp.eq.s32.totalorder %s33, 1
      %p140 = por %p138, %p139
      %p142 = scmp.ne.s32.totalorder %s127, %s141
      %p143 = scmp.eq.s32.totalorder %s33, 0
      %p144 = por %p142, %p143
      %s146 = sadd.s32 %s145, 1
      %p149 = scmp.eq.s32.totalorder %s27, 1
      %p150 = scmp.ne.s32.totalorder %s145, %s147
      %p151 = scmp.eq.s32.totalorder %s27, 0
      %p152 = por %p150, %p151
      %p153 = scmp.ne.s32.totalorder %s145, %s147
      %p154 = scmp.eq.s32.totalorder %s32, 1
      %p155 = por %p153, %p154
      %p156 = scmp.ne.s32.totalorder %s147, %s148
      %p157 = scmp.eq.s32.totalorder %s32, 0
      %p158 = por %p156, %p157
      %p159 = scmp.ne.s32.totalorder %s147, %s148
      %p160 = scmp.eq.s32.totalorder %s33, 1
      %p161 = por %p159, %p160
      %p163 = scmp.ne.s32.totalorder %s148, %s162
      %p164 = scmp.eq.s32.totalorder %s33, 0
      %p165 = por %p163, %p164
      %s167 = sadd.s32 %s166, 1
      %p170 = scmp.eq.s32.totalorder %s27, 1
      %p171 = scmp.ne.s32.totalorder %s166, %s168
      %p172 = scmp.eq.s32.totalorder %s27, 0
      %p173 = por %p171, %p172
      %p174 = scmp.ne.s32.totalorder %s166, %s168
      %p175 = scmp.eq.s32.totalorder %s32, 1
      %p176 = por %p174, %p175
      %p177 = scmp.ne.s32.totalorder %s168, %s169
      %p178 = scmp.eq.s32.totalorder %s32, 0
      %p179 = por %p177, %p178
      %p180 = scmp.ne.s32.totalorder %s168, %s169
      %p181 = scmp.eq.s32.totalorder %s33, 1
      %p182 = por %p180, %p181
      %p184 = scmp.ne.s32.totalorder %s169, %s183
      %p185 = scmp.eq.s32.totalorder %s33, 0
      %p186 = por %p184, %p185
      %s188 = sadd.s32 %s187, 1
      %p191 = scmp.eq.s32.totalorder %s27, 1
      %p192 = scmp.ne.s32.totalorder %s187, %s189
      %p193 = scmp.eq.s32.totalorder %s27, 0
      %p194 = por %p192, %p193
      %p195 = scmp.ne.s32.totalorder %s187, %s189
      %p196 = scmp.eq.s32.totalorder %s32, 1
      %p197 = por %p195, %p196
      %p198 = scmp.ne.s32.totalorder %s189, %s190
      %p199 = scmp.eq.s32.totalorder %s32, 0
      %p200 = por %p198, %p199
      %p201 = scmp.ne.s32.totalorder %s189, %s190
      %p202 = scmp.eq.s32.totalorder %s33, 1
      %p203 = por %p201, %p202
      %p205 = scmp.ne.s32.totalorder %s190, %s204
      %p206 = scmp.eq.s32.totalorder %s33, 0
      %p207 = por %p205, %p206
      %s209 = sadd.s32 %s208, 1
      %p212 = scmp.eq.s32.totalorder %s27, 1
      %p213 = scmp.ne.s32.totalorder %s208, %s210
      %p214 = scmp.eq.s32.totalorder %s27, 0
      %p215 = por %p213, %p214
      %p216 = scmp.ne.s32.totalorder %s208, %s210
      %p217 = scmp.eq.s32.totalorder %s32, 1
      %p218 = por %p216, %p217
      %p219 = scmp.ne.s32.totalorder %s210, %s211
      %p220 = scmp.eq.s32.totalorder %s32, 0
      %p221 = por %p219, %p220
      %p222 = scmp.ne.s32.totalorder %s210, %s211
      %p223 = scmp.eq.s32.totalorder %s33, 1
      %p224 = por %p222, %p223
      %p226 = scmp.ne.s32.totalorder %s211, %s225
      %p227 = scmp.eq.s32.totalorder %s33, 0
      %p228 = por %p226, %p227
      %s230 = sadd.s32 %s229, 1
      %p233 = scmp.eq.s32.totalorder %s27, 1
      %p234 = scmp.ne.s32.totalorder %s229, %s231
      %p235 = scmp.eq.s32.totalorder %s27, 0
      %p236 = por %p234, %p235
      %p237 = scmp.ne.s32.totalorder %s229, %s231
      %p238 = scmp.eq.s32.totalorder %s32, 1
      %p239 = por %p237, %p238
      %p240 = scmp.ne.s32.totalorder %s231, %s232
      %p241 = scmp.eq.s32.totalorder %s32, 0
      %p242 = por %p240, %p241
      %p243 = scmp.ne.s32.totalorder %s231, %s232
      %p244 = scmp.eq.s32.totalorder %s33, 1
      %p245 = por %p243, %p244
      %p247 = scmp.ne.s32.totalorder %s232, %s246
      %p248 = scmp.eq.s32.totalorder %s33, 0
      %p249 = por %p247, %p248
      %s251 = sadd.s32 %s250, 1
      %p254 = scmp.eq.s32.totalorder %s27, 1
      %p255 = scmp.ne.s32.totalorder %s250, %s252
      %p256 = scmp.eq.s32.totalorder %s27, 0
      %p257 = por %p255, %p256
      %p258 = scmp.ne.s32.totalorder %s250, %s252
      %p259 = scmp.eq.s32.totalorder %s32, 1
      %p260 = por %p258, %p259
      %p261 = scmp.ne.s32.totalorder %s252, %s253
      %p262 = scmp.eq.s32.totalorder %s32, 0
      %p263 = por %p261, %p262
      %p264 = scmp.ne.s32.totalorder %s252, %s253
      %p265 = scmp.eq.s32.totalorder %s33, 1
      %p266 = por %p264, %p265
      %p268 = scmp.ne.s32.totalorder %s253, %s267
      %p269 = scmp.eq.s32.totalorder %s33, 0
      %p270 = por %p268, %p269
      %s271 = ssub.s32 %s34, %s46
      %s272 = ssub.s32 %s35, %s42
      %s273 = sor.u32 %s271, %s272
      %p274 = scmp.eq.s32.totalorder %s273, 0
      %s276 = sadd.s32 %s275, 1
      %s277 = scalar_select %p274, %s275, %s276
      %p280 = pneg %p274
      %p281 = scmp.eq.s32.totalorder %s27, 1
      %p282 = por %p280, %p281
      %p283 = scmp.ne.s32.totalorder %s275, %s278
      %p284 = scmp.eq.s32.totalorder %s27, 0
      %p285 = por %p283, %p284
      %p286 = scmp.ne.s32.totalorder %s275, %s278
      %p287 = scmp.eq.s32.totalorder %s32, 1
      %p288 = por %p286, %p287
      %p289 = scmp.ne.s32.totalorder %s278, %s279
      %p290 = scmp.eq.s32.totalorder %s32, 0
      %p291 = por %p289, %p290
      %p292 = scmp.ne.s32.totalorder %s278, %s279
      %p293 = scmp.eq.s32.totalorder %s33, 1
      %p294 = por %p292, %p293
      %p296 = scmp.ne.s32.totalorder %s279, %s295
      %p297 = scmp.eq.s32.totalorder %s33, 0
      %p298 = por %p296, %p297
      %p299 = scmp.le.s32.totalorder 1, %s27
      %p300 = scmp.lt.s32.totalorder %s27, 3
      %p301 = pnand %p299, %p300
      %p302 = pneg %p301
      // Predicated region
      $region9: #{tpu_custom_call.1} parent=5 // pred_check
        _
      $region10: #{tpu_custom_call.1} parent=5 // pred_check_branch
        %304 = sbr.rel (%p301) target = $region12
      $region11: #{tpu_custom_call.1} parent=5 // pred_region
        %s305 = ssub.s32 %s27, 1
        // Predicated region
        $region13: #{tpu_custom_call.1} parent=11 // pred_check
          %p306 = pneg %p116
        $region14: #{tpu_custom_call.1} parent=11 // pred_check_branch
          %308 = sbr.rel (%p306) target = $region16
        $region15: #{tpu_custom_call.1} parent=11 // pred_region
          _
        $region16: #{tpu_custom_call.1} parent=11 // pred_fallthru
          _
        // Predicated region
        $region17: #{tpu_custom_call.1} parent=11 // pred_check
          %p309 = pneg %p137
        $region18: #{tpu_custom_call.1} parent=11 // pred_check_branch
          %311 = sbr.rel (%p309) target = $region20
        $region19: #{tpu_custom_call.1} parent=11 // pred_region
          _
        $region20: #{tpu_custom_call.1} parent=11 // pred_fallthru
          _
        // Predicated region
        $region21: #{tpu_custom_call.1} parent=11 // pred_check
          %p312 = pneg %p158
        $region22: #{tpu_custom_call.1} parent=11 // pred_check_branch
          %314 = sbr.rel (%p312) target = $region24
        $region23: #{tpu_custom_call.1} parent=11 // pred_region
          _
        $region24: #{tpu_custom_call.1} parent=11 // pred_fallthru
          _
        // Predicated region
        $region25: #{tpu_custom_call.1} parent=11 // pred_check
          %p315 = pneg %p179
        $region26: #{tpu_custom_call.1} parent=11 // pred_check_branch
          %317 = sbr.rel (%p315) target = $region28
        $region27: #{tpu_custom_call.1} parent=11 // pred_region
          _
        $region28: #{tpu_custom_call.1} parent=11 // pred_fallthru
          _
        // Predicated region
        $region29: #{tpu_custom_call.1} parent=11 // pred_check
          %p318 = pneg %p200
        $region30: #{tpu_custom_call.1} parent=11 // pred_check_branch
          %320 = sbr.rel (%p318) target = $region32
        $region31: #{tpu_custom_call.1} parent=11 // pred_region
          _
        $region32: #{tpu_custom_call.1} parent=11 // pred_fallthru
          _
        // Predicated region
        $region33: #{tpu_custom_call.1} parent=11 // pred_check
          %p321 = pneg %p221
        $region34: #{tpu_custom_call.1} parent=11 // pred_check_branch
          %323 = sbr.rel (%p321) target = $region36
        $region35: #{tpu_custom_call.1} parent=11 // pred_region
          _
        $region36: #{tpu_custom_call.1} parent=11 // pred_fallthru
          _
        // Predicated region
        $region37: #{tpu_custom_call.1} parent=11 // pred_check
          %p324 = pneg %p242
        $region38: #{tpu_custom_call.1} parent=11 // pred_check_branch
          %326 = sbr.rel (%p324) target = $region40
        $region39: #{tpu_custom_call.1} parent=11 // pred_region
          _
        $region40: #{tpu_custom_call.1} parent=11 // pred_fallthru
          _
        // Predicated region
        $region41: #{tpu_custom_call.1} parent=11 // pred_check
          %p327 = pneg %p263
        $region42: #{tpu_custom_call.1} parent=11 // pred_check_branch
          %329 = sbr.rel (%p327) target = $region44
        $region43: #{tpu_custom_call.1} parent=11 // pred_region
          _
        $region44: #{tpu_custom_call.1} parent=11 // pred_fallthru
          _
      $region12: #{tpu_custom_call.1} parent=5 // pred_fallthru
        _
      %p330 = scmp.lt.s32.totalorder %s27, 2
      // Predicated region
      $region45: #{tpu_custom_call.1} parent=5 // pred_check
        %p331 = pneg %p330
      $region46: #{tpu_custom_call.1} parent=5 // pred_check_branch
        %333 = sbr.rel (%p331) target = $region48
      $region47: #{tpu_custom_call.1} parent=5 // pred_region
        // Predicated region
        $region49: #{tpu_custom_call.1} parent=47 // pred_check
          %p334 = pneg %p61
        $region50: #{tpu_custom_call.1} parent=47 // pred_check_branch
          %336 = sbr.rel (%p334) target = $region52
        $region51: #{tpu_custom_call.1} parent=47 // pred_region
          %s337 = sand.u32 %s51, 1
          %s338 = scalar_lea.sflag [#allocation4], %s337
          %s339 = sand.u32 %s51, 1
          %s340 = smul.addr %s339, 8
          %s341 = scalar_lea.vmem [#allocation3], %s340
          %s342 = smul.u32 2, %s35
          %344 = vsyncadd %s338, 0
          %s345 = smul.addr %s34, 2
          %s346 = sadd.s32 %s342, %s345
          %s347 = smul.addr %s346, 4
          %s348 = scalar_lea.hbm %s0, %s347
          %s350 = sshll.u32 %s348, 4
          %s351 = int_to_ptr.hbm [resolvable:$true] %s350
          %s352 = sshll.u32 %s341, 4
          %s353 = int_to_ptr.vmem [resolvable:$true] %s352
          %355 = dma.hbm_to_vmem [thread:$0]  %s351, 128, %s353, %s338
        $region52: #{tpu_custom_call.1} parent=47 // pred_fallthru
          _
        // Predicated region
        $region53: #{tpu_custom_call.1} parent=47 // pred_check
          %p356 = pneg %p89
        $region54: #{tpu_custom_call.1} parent=47 // pred_check_branch
          %358 = sbr.rel (%p356) target = $region56
        $region55: #{tpu_custom_call.1} parent=47 // pred_region
          %s359 = sand.u32 %s79, 1
          %s360 = scalar_lea.sflag [#allocation7], %s359
          %s361 = sand.u32 %s79, 1
          %s362 = smul.addr %s361, 8
          %s363 = scalar_lea.vmem [#allocation6], %s362
          %s364 = smul.u32 2, %s35
          %366 = vsyncadd %s360, 0
          %s367 = smul.addr %s34, 2
          %s368 = sadd.s32 %s364, %s367
          %s369 = smul.addr %s368, 4
          %s370 = scalar_lea.hbm %s1, %s369
          %s372 = sshll.u32 %s370, 4
          %s373 = int_to_ptr.hbm [resolvable:$true] %s372
          %s374 = sshll.u32 %s363, 4
          %s375 = int_to_ptr.vmem [resolvable:$true] %s374
          %377 = dma.hbm_to_vmem [thread:$0]  %s373, 128, %s375, %s360
        $region56: #{tpu_custom_call.1} parent=47 // pred_fallthru
          _
      $region48: #{tpu_custom_call.1} parent=5 // pred_fallthru
        _
      %p378 = scmp.le.s32.totalorder 1, %s27
      %p379 = scmp.lt.s32.totalorder %s27, 3
      %p380 = pnand %p378, %p379
      %p381 = pneg %p380
      // Predicated region
      $region57: #{tpu_custom_call.1} parent=5 // pred_check
        _
      $region58: #{tpu_custom_call.1} parent=5 // pred_check_branch
        %383 = sbr.rel (%p380) target = $region60
      $region59: #{tpu_custom_call.1} parent=5 // pred_region
        %s384 = ssub.s32 %s27, 1
        %s385 = sand.u32 %s54, 1
        %s386 = scalar_lea.sflag [#allocation4], %s385
        %s387 = sand.u32 %s54, 1
        %s388 = smul.addr %s387, 8
        %s389 = scalar_lea.vmem [#allocation3], %s388
        // Predicated region
        $region61: #{tpu_custom_call.1} parent=59 // pred_check
          %p390 = pneg %p67
        $region62: #{tpu_custom_call.1} parent=59 // pred_check_branch
          %392 = sbr.rel (%p390) target = $region64
        $region63: #{tpu_custom_call.1} parent=59 // pred_region
          %394 = dma.done %s386, 128
        $region64: #{tpu_custom_call.1} parent=59 // pred_fallthru
          _
        %s395 = sand.u32 %s82, 1
        %s396 = scalar_lea.sflag [#allocation7], %s395
        %s397 = sand.u32 %s82, 1
        %s398 = smul.addr %s397, 8
        %s399 = scalar_lea.vmem [#allocation6], %s398
        // Predicated region
        $region65: #{tpu_custom_call.1} parent=59 // pred_check
          %p400 = pneg %p95
        $region66: #{tpu_custom_call.1} parent=59 // pred_check_branch
          %402 = sbr.rel (%p400) target = $region68
        $region67: #{tpu_custom_call.1} parent=59 // pred_region
          %404 = dma.done %s396, 128
        $region68: #{tpu_custom_call.1} parent=59 // pred_fallthru
          _
        %s405 = sand.u32 %s54, 1
        %s406 = scalar_lea.sflag [#allocation4], %s405
        %s407 = sand.u32 %s54, 1
        %s408 = smul.addr %s407, 8
        %s409 = scalar_lea.vmem [#allocation3], %s408
        %p410 = pneg %p67
        %p411 = pneg %p64
        %s412 = sand.u32 %s82, 1
        %s413 = scalar_lea.sflag [#allocation7], %s412
        %s414 = sand.u32 %s82, 1
        %s415 = smul.addr %s414, 8
        %s416 = scalar_lea.vmem [#allocation6], %s415
        %p417 = pneg %p95
        %p418 = pneg %p92
        %p419 = pneg %p116
        %p420 = pneg %p113
        %p421 = pneg %p137
        %p422 = pneg %p134
        %p423 = pneg %p158
        %p424 = pneg %p155
        %p425 = pneg %p179
        %p426 = pneg %p176
        %p427 = pneg %p200
        %p428 = pneg %p197
        %p429 = pneg %p221
        %p430 = pneg %p218
        %p431 = pneg %p242
        %p432 = pneg %p239
        %p433 = pneg %p263
        %p434 = pneg %p260
        %p435 = pneg %p291
        %p436 = pneg %p288
        %s437 = sand.u32 %s278, 1
        %s438 = scalar_lea.sflag [#allocation5], %s437
        %s439 = sand.u32 %s278, 1
        %s440 = smul.addr %s439, 8
        %s441 = scalar_lea.vmem [#allocation8], %s440
        %s442 = smul.u32 2, %s37
        %s443 = smul.u32 2, %s37
        %s444 = smul.u32 2, %s37
        %v445 = vld [vmem:[%s2] sm:$0x1]
        %v446 = vld [vmem:[#allocation2] sm:$0x1]
        %v447 = vld [vmem:[%s4] sm:$0x3]
        %v448 = vld [vmem:[%s5] sm:$0x3]
        %v449 = vld [vmem:[%s6] sm:$0x3]
        %v450 = vld [vmem:[%s7] sm:$0x3]
        %v451 = vld [vmem:[%s8] sm:$0xf]
        %v452 = vld [vmem:[%s9] sm:$0xf]
        %v453 = vld [vmem:[%s389] sm:$0xff]
        %v454 = vld [vmem:[%s399] sm:$0xff]
        %456 = vset.pattern.permute.xlu0 0
        %457 = vperm.xlu0 %456, %v446
        %v458 = vpop.permute.xlu0 %457
        %v460 = vperm.slane %v458, 0
        %462 = vst [vmem:[#allocation1] ss:$2 sm:$0xff] %v453
        %v463 = vld.sshfl [vmem:[#allocation1] sm:$0xff pattern:$0x75316420]
        %v464 = vld.sshfl [vmem:[#allocation1 + $0x8] sm:$0xff pattern:$0x75316420]
        %vm465 = vcmask 31744
        %v467 = vsel %vm465, %v445, 0
        %vm469 = vcmask 1043456
        %v470 = vsel %vm469, %v463, 0
        %v472 = vsel %vm469, %v464, 0
        %474 = vmatpush.msra.mxu0 0.0
        %475 = vmatpush.msra.mxu0 0.0
        %476 = vmatpush.msra.mxu0 0.0
        %477 = vmatpush.msra.mxu0 0.0
        %478 = vmatpush.msra.mxu0 0.0
        %479 = vmatpush.msra.mxu0 0.0
        %480 = vmatpush.msra.mxu0 0.0
        %481 = vmatpush.msra.mxu0 0.0
        %482 = vmatpush.msra.mxu0 0.0
        %483 = vmatpush.msra.mxu0 0.0
        %484 = vmatpush.msra.mxu0 0.0
        %485 = vmatpush.msra.mxu0 0.0
        %486 = vmatpush.msra.mxu0 0.0
        %487 = vmatpush.msra.mxu0 0.0
        %488 = vmatpush.msra.mxu0 0.0
        %489 = vmatpush.msra.mxu0 %v470
        %490 = vmatmul.f32.gmra.mxu0 %v467
        %v491 = vpop.f32.mrf.mxu0
        %v492 = vadd.f32 %v460, %v491
        %493 = vdwg.mxu0
        %494 = vmatpush.msra.mxu0 0.0
        %495 = vmatpush.msra.mxu0 0.0
        %496 = vmatpush.msra.mxu0 0.0
        %497 = vmatpush.msra.mxu0 0.0
        %498 = vmatpush.msra.mxu0 0.0
        %499 = vmatpush.msra.mxu0 0.0
        %500 = vmatpush.msra.mxu0 0.0
        %501 = vmatpush.msra.mxu0 0.0
        %502 = vmatpush.msra.mxu0 0.0
        %503 = vmatpush.msra.mxu0 0.0
        %504 = vmatpush.msra.mxu0 0.0
        %505 = vmatpush.msra.mxu0 0.0
        %506 = vmatpush.msra.mxu0 0.0
        %507 = vmatpush.msra.mxu0 0.0
        %508 = vmatpush.msra.mxu0 0.0
        %509 = vmatpush.msra.mxu0 %v472
        %510 = vmatmul.f32.gmra.mxu0 %v467
        %v511 = vpop.f32.mrf.mxu0
        %v512 = vadd.f32 %v460, %v511
        %513 = vdwg.mxu0
        %515 = vset.pattern.permute.xlu0 0
        %516 = vperm.xlu0 %515, %v448
        %v517 = vpop.permute.xlu0 %516
        %519 = vst [vmem:[#allocation1] ss:$2 sm:$0xff] %v453
        %v520 = vld.sshfl [vmem:[#allocation1] sm:$0xff pattern:$0x75316420]
        %v521 = vld.sshfl [vmem:[#allocation1 + $0x8] sm:$0xff pattern:$0x75316420]
        %v523 = vsel %vm465, %v447, 0
        %v525 = vsel %vm469, %v520, 0
        %v527 = vsel %vm469, %v521, 0
        %529 = vmatpush.msra.mxu0 0.0
        %530 = vmatpush.msra.mxu0 0.0
        %531 = vmatpush.msra.mxu0 0.0
        %532 = vmatpush.msra.mxu0 0.0
        %533 = vmatpush.msra.mxu0 0.0
        %534 = vmatpush.msra.mxu0 0.0
        %535 = vmatpush.msra.mxu0 0.0
        %536 = vmatpush.msra.mxu0 0.0
        %537 = vmatpush.msra.mxu0 0.0
        %538 = vmatpush.msra.mxu0 0.0
        %539 = vmatpush.msra.mxu0 0.0
        %540 = vmatpush.msra.mxu0 0.0
        %541 = vmatpush.msra.mxu0 0.0
        %542 = vmatpush.msra.mxu0 0.0
        %543 = vmatpush.msra.mxu0 0.0
        %544 = vmatpush.msra.mxu0 %v525
        %545 = vmatmul.f32.gmra.mxu0 %v523
        %v546 = vpop.f32.mrf.mxu0
        %v547 = vadd.f32 %v517, %v546
        %548 = vdwg.mxu0
        %549 = vmatpush.msra.mxu0 0.0
        %550 = vmatpush.msra.mxu0 0.0
        %551 = vmatpush.msra.mxu0 0.0
        %552 = vmatpush.msra.mxu0 0.0
        %553 = vmatpush.msra.mxu0 0.0
        %554 = vmatpush.msra.mxu0 0.0
        %555 = vmatpush.msra.mxu0 0.0
        %556 = vmatpush.msra.mxu0 0.0
        %557 = vmatpush.msra.mxu0 0.0
        %558 = vmatpush.msra.mxu0 0.0
        %559 = vmatpush.msra.mxu0 0.0
        %560 = vmatpush.msra.mxu0 0.0
        %561 = vmatpush.msra.mxu0 0.0
        %562 = vmatpush.msra.mxu0 0.0
        %563 = vmatpush.msra.mxu0 0.0
        %564 = vmatpush.msra.mxu0 %v527
        %565 = vmatmul.f32.gmra.mxu0 %v523
        %v566 = vpop.f32.mrf.mxu0
        %v567 = vadd.f32 %v517, %v566
        %568 = vdwg.mxu0
        %570 = vset.pattern.permute.xlu0 0
        %571 = vperm.xlu0 %570, %v450
        %v572 = vpop.permute.xlu0 %571
        %575 = vst [vmem:[#allocation1] ss:$2 sm:$0xff] %v454
        %v576 = vld.sshfl [vmem:[#allocation1] sm:$0xff pattern:$0x75316420]
        %v577 = vld.sshfl [vmem:[#allocation1 + $0x8] sm:$0xff pattern:$0x75316420]
        %v579 = vsel %vm465, %v449, 0
        %v581 = vsel %vm469, %v576, 0
        %v583 = vsel %vm469, %v577, 0
        %585 = vmatpush.msra.mxu0 0.0
        %586 = vmatpush.msra.mxu0 0.0
        %587 = vmatpush.msra.mxu0 0.0
        %588 = vmatpush.msra.mxu0 0.0
        %589 = vmatpush.msra.mxu0 0.0
        %590 = vmatpush.msra.mxu0 0.0
        %591 = vmatpush.msra.mxu0 0.0
        %592 = vmatpush.msra.mxu0 0.0
        %593 = vmatpush.msra.mxu0 0.0
        %594 = vmatpush.msra.mxu0 0.0
        %595 = vmatpush.msra.mxu0 0.0
        %596 = vmatpush.msra.mxu0 0.0
        %597 = vmatpush.msra.mxu0 0.0
        %598 = vmatpush.msra.mxu0 0.0
        %599 = vmatpush.msra.mxu0 0.0
        %600 = vmatpush.msra.mxu0 %v581
        %601 = vmatmul.f32.gmra.mxu0 %v579
        %v602 = vpop.f32.mrf.mxu0
        %v603 = vadd.f32 %v572, %v602
        %604 = vdwg.mxu0
        %605 = vmatpush.msra.mxu0 0.0
        %606 = vmatpush.msra.mxu0 0.0
        %607 = vmatpush.msra.mxu0 0.0
        %608 = vmatpush.msra.mxu0 0.0
        %609 = vmatpush.msra.mxu0 0.0
        %610 = vmatpush.msra.mxu0 0.0
        %611 = vmatpush.msra.mxu0 0.0
        %612 = vmatpush.msra.mxu0 0.0
        %613 = vmatpush.msra.mxu0 0.0
        %614 = vmatpush.msra.mxu0 0.0
        %615 = vmatpush.msra.mxu0 0.0
        %616 = vmatpush.msra.mxu0 0.0
        %617 = vmatpush.msra.mxu0 0.0
        %618 = vmatpush.msra.mxu0 0.0
        %619 = vmatpush.msra.mxu0 0.0
        %620 = vmatpush.msra.mxu0 %v583
        %621 = vmatmul.f32.gmra.mxu0 %v579
        %v622 = vpop.f32.mrf.mxu0
        %v623 = vadd.f32 %v572, %v622
        %624 = vdwg.mxu0
        %v625 = vperm.slane %v492, 0
        %v626 = vperm.slane %v512, 0
        %v627 = vmul.f32 %v625, %v547
        %v628 = vmul.f32 %v626, %v567
        %v629 = vadd.f32 %v627, %v603
        %v630 = vadd.f32 %v628, %v623
        %632 = vset.pattern.permute.xlu0 0
        %633 = vperm.xlu0 %632, %v452
        %v634 = vpop.permute.xlu0 %633
        %vm636 = vcmask 15360
        %v638 = vsel %vm636, %v451, 0
        %vm640 = vcmask 1041408
        %v642 = vsel %vm640, %v629, 0
        %v645 = vsel %vm640, %v630, 0
        %647 = vmatpush.msra.mxu0 0.0
        %648 = vmatpush.msra.mxu0 0.0
        %649 = vmatpush.msra.mxu0 0.0
        %650 = vmatpush.msra.mxu0 0.0
        %651 = vmatpush.msra.mxu0 0.0
        %652 = vmatpush.msra.mxu0 0.0
        %653 = vmatpush.msra.mxu0 0.0
        %654 = vmatpush.msra.mxu0 0.0
        %655 = vmatpush.msra.mxu0 0.0
        %656 = vmatpush.msra.mxu0 0.0
        %657 = vmatpush.msra.mxu0 0.0
        %658 = vmatpush.msra.mxu0 0.0
        %659 = vmatpush.msra.mxu0 0.0
        %660 = vmatpush.msra.mxu0 0.0
        %661 = vmatpush.msra.mxu0 0.0
        %662 = vmatpush.msra.mxu0 %v642
        %663 = vmatmul.f32.gmra.mxu0 %v638
        %v664 = vpop.f32.mrf.mxu0
        %v665 = vadd.f32 %v634, %v664
        %666 = vdwg.mxu0
        %667 = vmatpush.msra.mxu0 0.0
        %668 = vmatpush.msra.mxu0 0.0
        %669 = vmatpush.msra.mxu0 0.0
        %670 = vmatpush.msra.mxu0 0.0
        %671 = vmatpush.msra.mxu0 0.0
        %672 = vmatpush.msra.mxu0 0.0
        %673 = vmatpush.msra.mxu0 0.0
        %674 = vmatpush.msra.mxu0 0.0
        %675 = vmatpush.msra.mxu0 0.0
        %676 = vmatpush.msra.mxu0 0.0
        %677 = vmatpush.msra.mxu0 0.0
        %678 = vmatpush.msra.mxu0 0.0
        %679 = vmatpush.msra.mxu0 0.0
        %680 = vmatpush.msra.mxu0 0.0
        %681 = vmatpush.msra.mxu0 0.0
        %682 = vmatpush.msra.mxu0 %v645
        %683 = vmatmul.f32.gmra.mxu0 %v638
        %v684 = vpop.f32.mrf.mxu0
        %v685 = vadd.f32 %v634, %v684
        %686 = vdwg.mxu0
        %v687 = vmax.f32 %v665, 0.0
        %v688 = vmax.f32 %v685, 0.0
        %v691 = vrot.slane %v688, 4
        %v692 = vsel %vm469, %v687, %v691
        %694 = vst [vmem:[%s441] sm:$0xff] %v692
        %s695 = sand.u32 %s278, 1
        %s696 = scalar_lea.sflag [#allocation5], %s695
        %s697 = sand.u32 %s278, 1
        %s698 = smul.addr %s697, 8
        %s699 = scalar_lea.vmem [#allocation8], %s698
        // Predicated region
        $region69: #{tpu_custom_call.1} parent=59 // pred_check
          %p700 = pneg %p288
        $region70: #{tpu_custom_call.1} parent=59 // pred_check_branch
          %702 = sbr.rel (%p700) target = $region72
        $region71: #{tpu_custom_call.1} parent=59 // pred_region
          %s703 = smul.u32 2, %s37
          %705 = vsyncadd %s696, 0
          %s706 = smul.addr %s36, 2
          %s707 = sadd.s32 %s703, %s706
          %s708 = smul.addr %s707, 4
          %s709 = scalar_lea.hbm %s10, %s708
          %s711 = sshll.u32 %s699, 4
          %s712 = int_to_ptr.vmem [resolvable:$true] %s711
          %s713 = sshll.u32 %s709, 4
          %s714 = int_to_ptr.hbm [resolvable:$true] %s713
          %716 = dma.vmem_to_hbm [thread:$0]  %s712, 128, %s714, %s696
        $region72: #{tpu_custom_call.1} parent=59 // pred_fallthru
          _
      $region60: #{tpu_custom_call.1} parent=5 // pred_fallthru
        _
      %p717 = scmp.le.s32.totalorder 2, %s27
      // Predicated region
      $region73: #{tpu_custom_call.1} parent=5 // pred_check
        %p718 = pneg %p717
      $region74: #{tpu_custom_call.1} parent=5 // pred_check_branch
        %720 = sbr.rel (%p718) target = $region76
      $region75: #{tpu_custom_call.1} parent=5 // pred_region
        %s721 = ssub.s32 %s27, 2
        // Predicated region
        $region77: #{tpu_custom_call.1} parent=75 // pred_check
          %p722 = pneg %p294
        $region78: #{tpu_custom_call.1} parent=75 // pred_check_branch
          %724 = sbr.rel (%p722) target = $region80
        $region79: #{tpu_custom_call.1} parent=75 // pred_region
          %s725 = sand.u32 %s279, 1
          %s726 = scalar_lea.sflag [#allocation5], %s725
          %s727 = sand.u32 %s279, 1
          %s728 = smul.addr %s727, 8
          %s729 = scalar_lea.vmem [#allocation8], %s728
          %731 = dma.done %s726, 128
        $region80: #{tpu_custom_call.1} parent=75 // pred_fallthru
          _
      $region76: #{tpu_custom_call.1} parent=5 // pred_fallthru
        _
    $region6: #{tpu_custom_call.1} parent=1 // loop_footer
      %s31 = sadd.s32 1, %s27
    $region7: #{tpu_custom_call.1} parent=1 // loop_footer_branch
      %26 = sbr.rel target = $region3
    $region8: #{tpu_custom_call.1} parent=1 // loop_exit
      _
    %732 = vsyncpa [#allocation4], 1
    %s733 = scalar_lea.sflag [#allocation4], 1
    %734 = vsyncpa %s733, 1
    %735 = vsyncpa [#allocation7], 1
    %s736 = scalar_lea.sflag [#allocation7], 1
    %737 = vsyncpa %s736, 1
    %738 = vsyncpa [#allocation5], 1
    %s739 = scalar_lea.sflag [#allocation5], 1
    %740 = vsyncpa %s739, 1

</llo_original>
